<compile_context>
chip_gen: v6e
topology: v6e:2x2x1
jax: 0.10.0
libtpu: 0.0.40
codegen_flags: <defaults>
</compile_context>

<pallas_src>
import math

import jax
import jax.numpy as jnp
from jax.experimental import pallas as pl
from jax.experimental.pallas import tpu as pltpu

BN_EPS = 1e-5


def _sigmoid_approx(z):
    # sigmoid(z) = 1 / (1 + exp(-z)); exp and the approximate reciprocal both
    # run on the EUP slot, freeing VALU bundles for the BN/gating elementwise.
    return pl.reciprocal(1.0 + jnp.exp(-z), approx=True)


def _gating_bn_kernel(xmm_ref, xg_ref, w_ref, gamma_ref, beta_ref, o_ref):
    # MXU: (B, dim) bf16 @ (dim, TN) bf16 -> (B, TN) f32 accumulation.
    gates = jnp.dot(xmm_ref[...], w_ref[...],
                    preferred_element_type=jnp.float32)
    # BatchNorm1d (training mode): per-feature batch mean / biased variance,
    # single pass (sum + sum-of-squares) over the (B, TN) tile.
    inv_b = 1.0 / gates.shape[0]
    s = jnp.sum(gates, axis=0, keepdims=True)
    ss = jnp.sum(gates * gates, axis=0, keepdims=True)
    mean = s * inv_b
    var = jnp.maximum(ss * inv_b - mean * mean, 0.0)   # guard cancellation
    inv_std = jax.lax.rsqrt(var + BN_EPS)
    gates = (gates - mean) * (inv_std * gamma_ref[...]) + beta_ref[...]
    gates = _sigmoid_approx(gates)
    o_ref[...] = (xg_ref[...].astype(jnp.float32) * gates).astype(o_ref.dtype)


def _gating_bias_kernel(xmm_ref, xg_ref, w_ref, b_ref, o_ref):
    gates = jnp.dot(xmm_ref[...], w_ref[...],
                    preferred_element_type=jnp.float32)
    gates = _sigmoid_approx(gates + b_ref[...])
    o_ref[...] = (xg_ref[...].astype(jnp.float32) * gates).astype(o_ref.dtype)


def _pick_block_n(dim, block_n):
    if block_n is not None:
        if dim % block_n != 0:
            raise ValueError(f"block_n={block_n} must divide dim={dim}")
        return block_n
    # Largest lane-aligned divisor of dim up to 512 (multiple of 256 preferred
    # for the v6e/v7x MXU, 128 works on v5e); fall back to the full width.
    for cand in (512, 384, 256, 128):
        if dim % cand == 0:
            return cand
    return dim


def gating_context(x, weights, *, add_batch_norm=True,
                   gamma=None, beta=None, biases=None,
                   block_n=None, matmul_dtype=jnp.bfloat16):
    """Pallas implementation of GatingContext.forward.

    x:          (B, dim) float32
    weights:    (dim, dim) float32 (cast to `matmul_dtype` for the MXU)
    gamma/beta: (dim,) BN affine params   (add_batch_norm=True)
    biases:     (dim,) gating biases      (add_batch_norm=False)
    """
    B, dim = x.shape
    assert weights.shape == (dim, dim)
    tn = _pick_block_n(dim, block_n)
    grid = (dim // tn,)

    # Cast the MXU operands in the wrapper (one XLA cast, not one per grid
    # step) -> halves the dominant dim*dim weight DMA and the resident-x DMA.
    x_mm = x.astype(matmul_dtype)
    w_mm = weights.astype(matmul_dtype)
    x_bytes = x.dtype.itemsize
    w_bytes = jnp.dtype(matmul_dtype).itemsize

    out_shape = jax.ShapeDtypeStruct((B, dim), x.dtype)

    xmm_spec = pl.BlockSpec((B, dim), lambda j: (0, 0))  # constant index: DMA'd once, resident
    xg_spec = pl.BlockSpec((B, tn), lambda j: (0, j))    # gating tile, lock-step with output
    w_spec = pl.BlockSpec((dim, tn), lambda j: (0, j))   # streamed / double-buffered
    p_spec = pl.BlockSpec((1, tn), lambda j: (0, j))
    o_spec = pl.BlockSpec((B, tn), lambda j: (0, j))

    cost = pl.CostEstimate(
        flops=2 * B * dim * dim,
        transcendentals=B * dim,                         # exp in the sigmoid
        bytes_accessed=(B * dim * w_bytes                # x (bf16, MXU LHS)
                        + B * dim * x_bytes              # x (gating tiles)
                        + dim * dim * w_bytes            # weights
                        + 4 * dim * 4                    # BN / bias params
                        + B * dim * x_bytes),            # output
    )

    # Per-step VMEM residency (conservatively assume double-buffering for
    # every operand, including the resident x).
    vmem_est = (2 * B * dim * w_bytes                    # resident bf16 x
                + 2 * B * tn * x_bytes                   # x gating tiles
                + 2 * dim * tn * w_bytes                 # W tiles
                + 2 * B * tn * x_bytes                   # output tiles
                + 4 * 2 * tn * 4)                        # BN / bias param tiles
    vmem_limit = None
    if vmem_est > 32 * 1024 * 1024:                      # past default scoped limit
        vmem_limit = min(vmem_est * 5 // 4, 64 * 1024 * 1024)  # v7x physical cap

    params = pltpu.CompilerParams(
        dimension_semantics=("parallel",),               # per-feature tiles are independent
        vmem_limit_bytes=vmem_limit,
    )

    if add_batch_norm:
        gamma2 = gamma.reshape(1, dim).astype(jnp.float32)
        beta2 = beta.reshape(1, dim).astype(jnp.float32)
        return pl.pallas_call(
            _gating_bn_kernel,
            out_shape=out_shape,
            grid=grid,
            in_specs=[xmm_spec, xg_spec, w_spec, p_spec, p_spec],
            out_specs=o_spec,
            compiler_params=params,
            cost_estimate=cost,
        )(x_mm, x, w_mm, gamma2, beta2)
    else:
        bias2 = biases.reshape(1, dim).astype(jnp.float32)
        return pl.pallas_call(
            _gating_bias_kernel,
            out_shape=out_shape,
            grid=grid,
            in_specs=[xmm_spec, xg_spec, w_spec, p_spec],
            out_specs=o_spec,
            compiler_params=params,
            cost_estimate=cost,
        )(x_mm, x, w_mm, bias2)


def _reference(x, weights, add_batch_norm, gamma, beta, biases,
               matmul_dtype=jnp.bfloat16):
    # Mirrors the kernel's bf16 MXU operands (f32 accumulation) so the
    # comparison isolates the kernel's BN / sigmoid / gating math.
    gates = jnp.dot(x.astype(matmul_dtype), weights.astype(matmul_dtype),
                    preferred_element_type=jnp.float32)
    if add_batch_norm:
        mean = gates.mean(axis=0, keepdims=True)
        var = ((gates - mean) ** 2).mean(axis=0, keepdims=True)
        gates = (gates - mean) / jnp.sqrt(var + BN_EPS) * gamma + beta
    else:
        gates = gates + biases
    gates = jax.nn.sigmoid(gates)
    return x * gates


if __name__ == "__main__":
    key = jax.random.PRNGKey(0)
    B, dim = 8, 256   # small shapes: B multiple of 8 sublanes, dim multiple of 128 lanes

    k_x, k_w, k_b = jax.random.split(key, 3)
    x = jax.random.normal(k_x, (B, dim), dtype=jnp.float32)

    # Parameter init matching the module __init__ shapes:
    #   gating_weights = randn(dim, dim) / sqrt(dim)
    #   BN: gamma = 1, beta = 0 (PyTorch default); gating_biases = randn(dim)/sqrt(dim)
    weights = jax.random.normal(k_w, (dim, dim), dtype=jnp.float32) / math.sqrt(dim)
    gamma = jnp.ones((dim,), dtype=jnp.float32)
    beta = jnp.zeros((dim,), dtype=jnp.float32)
    biases = jax.random.normal(k_b, (dim,), dtype=jnp.float32) / math.sqrt(dim)

    # block_n=128 so the test actually exercises a multi-step (grid=(2,))
    # pipeline; larger dims pick bigger blocks automatically.
    out_bn = gating_context(x, weights, add_batch_norm=True,
                            gamma=gamma, beta=beta, block_n=128)
    jax.block_until_ready(out_bn)
    ref_bn = _reference(x, weights, True, gamma, beta, biases)
    # Tolerance covers the EUP approx reciprocal + one-pass BN variance.
    assert jnp.allclose(out_bn, ref_bn, atol=1e-2, rtol=1e-2), "BN path mismatch"

    out_bias = gating_context(x, weights, add_batch_norm=False, biases=biases,
                              block_n=128)
    jax.block_until_ready(out_bias)
    ref_bias = _reference(x, weights, False, gamma, beta, biases)
    assert jnp.allclose(out_bias, ref_bias, atol=1e-2, rtol=1e-2), "bias path mismatch"

    print("KERNEL_OK")
</pallas_src>

<mosaic_0001>
module attributes {stable_mosaic.version = 11 : i64} {
  func.func @_gating_bn_kernel(%arg0: i32, %arg1: memref<8x256xbf16, #tpu.memory_space<vmem>>, %arg2: memref<8x128xf32, #tpu.memory_space<vmem>>, %arg3: memref<256x128xbf16, #tpu.memory_space<vmem>>, %arg4: memref<1x128xf32, #tpu.memory_space<vmem>>, %arg5: memref<1x128xf32, #tpu.memory_space<vmem>>, %arg6: memref<8x128xf32, #tpu.memory_space<vmem>>) attributes {dimension_semantics = [#tpu.dimension_semantics<parallel>], iteration_bounds = array<i64: 2>, scalar_prefetch = 0 : i64, scratch_operands = 0 : i64, tpu.core_type = #tpu.core_type<tc>, window_params = [{pipeline_mode = #tpu.pipeline_mode<synchronous>, transform_indices = @transform_0, window_bounds = array<i64: 8, 256>}, {transform_indices = @transform_1, window_bounds = array<i64: 8, 128>}, {transform_indices = @transform_2, window_bounds = array<i64: 256, 128>}, {transform_indices = @transform_3, window_bounds = array<i64: 1, 128>}, {transform_indices = @transform_4, window_bounds = array<i64: 1, 128>}, {transform_indices = @transform_5, window_bounds = array<i64: 8, 128>}]} {
    %c0 = arith.constant 0 : index
    %c0_0 = arith.constant 0 : index
    %0 = vector.load %arg1[%c0, %c0_0] : memref<8x256xbf16, #tpu.memory_space<vmem>>, vector<8x256xbf16>
    %c0_1 = arith.constant 0 : index
    %c0_2 = arith.constant 0 : index
    %1 = vector.load %arg3[%c0_1, %c0_2] : memref<256x128xbf16, #tpu.memory_space<vmem>>, vector<256x128xbf16>
    %cst = arith.constant dense<0.000000e+00> : vector<8x128xf32>
    %2 = tpu.matmul %0, %1, %cst {dimension_numbers = #tpu.dot_dimension_numbers<[1], [0], [0], [1], [0, 0, 1, 1], [], []>} : vector<8x256xbf16>, vector<256x128xbf16>, vector<8x128xf32> -> vector<8x128xf32>
    %cst_3 = arith.constant dense<0.000000e+00> : vector<128xf32>
    %3 = vector.multi_reduction <add>, %2, %cst_3 [0] : vector<8x128xf32> to vector<128xf32>
    %4 = vector.shape_cast %3 : vector<128xf32> to vector<1x128xf32>
    %5 = arith.mulf %2, %2 : vector<8x128xf32>
    %cst_4 = arith.constant dense<0.000000e+00> : vector<128xf32>
    %6 = vector.multi_reduction <add>, %5, %cst_4 [0] : vector<8x128xf32> to vector<128xf32>
    %7 = vector.shape_cast %6 : vector<128xf32> to vector<1x128xf32>
    %cst_5 = arith.constant 1.250000e-01 : f32
    %8 = vector.broadcast %cst_5 : f32 to vector<1x128xf32>
    %9 = arith.mulf %4, %8 : vector<1x128xf32>
    %cst_6 = arith.constant 1.250000e-01 : f32
    %10 = vector.broadcast %cst_6 : f32 to vector<1x128xf32>
    %11 = arith.mulf %7, %10 : vector<1x128xf32>
    %12 = arith.mulf %9, %9 : vector<1x128xf32>
    %13 = arith.subf %11, %12 : vector<1x128xf32>
    %cst_7 = arith.constant 0.000000e+00 : f32
    %14 = vector.broadcast %cst_7 : f32 to vector<1x128xf32>
    %15 = arith.maximumf %13, %14 : vector<1x128xf32>
    %cst_8 = arith.constant 9.99999974E-6 : f32
    %16 = vector.broadcast %cst_8 : f32 to vector<1x128xf32>
    %17 = arith.addf %15, %16 : vector<1x128xf32>
    %18 = math.rsqrt %17 : vector<1x128xf32>
    %19 = vector.broadcast %9 : vector<1x128xf32> to vector<8x128xf32>
    %20 = arith.subf %2, %19 : vector<8x128xf32>
    %c0_9 = arith.constant 0 : index
    %c0_10 = arith.constant 0 : index
    %21 = vector.load %arg4[%c0_9, %c0_10] : memref<1x128xf32, #tpu.memory_space<vmem>>, vector<1x128xf32>
    %22 = arith.mulf %18, %21 : vector<1x128xf32>
    %23 = vector.broadcast %22 : vector<1x128xf32> to vector<8x128xf32>
    %24 = arith.mulf %20, %23 : vector<8x128xf32>
    %c0_11 = arith.constant 0 : index
    %c0_12 = arith.constant 0 : index
    %25 = vector.load %arg5[%c0_11, %c0_12] : memref<1x128xf32, #tpu.memory_space<vmem>>, vector<1x128xf32>
    %26 = vector.broadcast %25 : vector<1x128xf32> to vector<8x128xf32>
    %27 = arith.addf %24, %26 : vector<8x128xf32>
    %cst_13 = arith.constant 0.000000e+00 : f32
    %28 = vector.broadcast %cst_13 : f32 to vector<8x128xf32>
    %29 = arith.subf %28, %27 : vector<8x128xf32>
    %30 = math.exp %29 : vector<8x128xf32>
    %cst_14 = arith.constant 1.000000e+00 : f32
    %31 = vector.broadcast %cst_14 : f32 to vector<8x128xf32>
    %32 = arith.addf %31, %30 : vector<8x128xf32>
    %33 = tpu.reciprocal %32 {approx = true} : vector<8x128xf32> -> vector<8x128xf32>
    %c0_15 = arith.constant 0 : index
    %c0_16 = arith.constant 0 : index
    %34 = vector.load %arg2[%c0_15, %c0_16] : memref<8x128xf32, #tpu.memory_space<vmem>>, vector<8x128xf32>
    %35 = arith.mulf %34, %33 : vector<8x128xf32>
    %c0_17 = arith.constant 0 : index
    %c0_18 = arith.constant 0 : index
    %36 = vector.load %arg6[%c0_17, %c0_18] : memref<8x128xf32, #tpu.memory_space<vmem>>, vector<8x128xf32>
    tpu.vector_store %arg6[%c0_17, %c0_18], %35 {strides = array<i32>} : memref<8x128xf32, #tpu.memory_space<vmem>>, vector<8x128xf32>,
    return
  }
  func.func @transform_0(%arg0: i32) -> (i32, i32) {
    %c0_i32 = arith.constant 0 : i32
    %c0_i32_0 = arith.constant 0 : i32
    %c0_i32_1 = arith.constant 0 : i32
    return %c0_i32, %c0_i32_0 : i32, i32
  }
  func.func @transform_1(%arg0: i32) -> (i32, i32) {
    %c0_i32 = arith.constant 0 : i32
    %c0_i32_0 = arith.constant 0 : i32
    return %c0_i32, %arg0 : i32, i32
  }
  func.func @transform_2(%arg0: i32) -> (i32, i32) {
    %c0_i32 = arith.constant 0 : i32
    %c0_i32_0 = arith.constant 0 : i32
    return %c0_i32, %arg0 : i32, i32
  }
  func.func @transform_3(%arg0: i32) -> (i32, i32) {
    %c0_i32 = arith.constant 0 : i32
    %c0_i32_0 = arith.constant 0 : i32
    return %c0_i32, %arg0 : i32, i32
  }
  func.func @transform_4(%arg0: i32) -> (i32, i32) {
    %c0_i32 = arith.constant 0 : i32
    %c0_i32_0 = arith.constant 0 : i32
    return %c0_i32, %arg0 : i32, i32
  }
  func.func @transform_5(%arg0: i32) -> (i32, i32) {
    %c0_i32 = arith.constant 0 : i32
    %c0_i32_0 = arith.constant 0 : i32
    return %c0_i32, %arg0 : i32, i32
  }
}

</mosaic_0001>

<llo_original>
// kernel: tpu_custom_call.1
$region0: #{tpu_custom_call.1}
  #allocation0 [shape = 'u32[]', space=smem, size = 0x4, offset = 0x4, fixed_abs, tag = 'smem constant byte address 0x4 - core index']
  #allocation1 [shape = 'u32[144,128]{1,0:T(1,128)}', space=vmem, size = 0x12000, scoped, tag = 'internal scratch']
  %s0 = inlined_call_operand.hbm [shape: bf16[8,256], index: 0, kind: input, shape index: {}]
  %s1 = inlined_call_operand.hbm [shape: f32[8,256], index: 1, kind: input, shape index: {}]
  %s2 = inlined_call_operand.hbm [shape: bf16[256,256], index: 2, kind: input, shape index: {}]
  %s3 = inlined_call_operand.vmem [shape: f32[1,256], index: 3, kind: input, shape index: {}]
  %s4 = inlined_call_operand.vmem [shape: f32[1,256], index: 4, kind: input, shape index: {}]
  %s5 = inlined_call_operand.hbm [shape: f32[8,256], index: 5, kind: output, shape index: {}]
  %s6 = sld [smem:[#allocation0]]
  $region65: #{tpu_custom_call.1} parent=0
    _
  %s8 = ssub.s32 1, %s6
  %s9 = scalar_select 0, %s8, %s6
  $region1: #{tpu_custom_call.1} parent=0
    #allocation2 [shape = 'u8[4096]{0}', space=vmem, size = 0x1000, scoped, tag = 'input window, operand 0, single buffered']
    #allocation3 [shape = 's32[2]{0}', space=sflag, size = 0x8, scoped, tag = 'scoped memory for tpu_custom_call.1']
    #allocation4 [shape = 's32[2]{0}', space=sflag, size = 0x8, scoped, tag = 'scoped memory for tpu_custom_call.1']
    #allocation5 [shape = 'u8[8192]{0}', space=vmem, size = 0x2000, scoped, tag = 'input window, operand 1']
    #allocation6 [shape = 's32[2]{0}', space=sflag, size = 0x8, scoped, tag = 'scoped memory for tpu_custom_call.1']
    #allocation7 [shape = 'u8[131072]{0}', space=vmem, size = 0x20000, scoped, tag = 'input window, operand 2']
    #allocation8 [shape = 'u8[8192]{0}', space=vmem, size = 0x2000, scoped, tag = 'output window, operand 0']
    %10 = vsyncpa [#allocation3], 0
    %11 = vsyncpa [#allocation6], 0
    %s12 = scalar_lea.sflag [#allocation6], 1
    %13 = vsyncpa %s12, 0
    %14 = vsyncpa [#allocation4], 0
    %s15 = scalar_lea.sflag [#allocation4], 1
    %16 = vsyncpa %s15, 0
    loop: start=0, step=1, limit=4
    $region2: #{tpu_custom_call.1} parent=1 // loop_pre_header
      _
    $region3: #{tpu_custom_call.1} parent=1 // loop_header
      %s18 = sphi 0, %s22
      %p19 = scmp.ge.s32.totalorder %s18, 4
      %s26 = sphi 0, %s26
      %s28 = sphi 0, %s26
      %s29 = sphi 0, %s28
      %s43 = sphi 0, %s29
      %s49 = sphi 0, %s51
      %s52 = sphi 0, %s49
      %s53 = sphi 0, %s52
      %s69 = sphi 0, %s53
      %s75 = sphi 0, %s77
      %s78 = sphi 0, %s75
      %s79 = sphi 0, %s78
      %s95 = sphi 0, %s79
      %s101 = sphi 0, %s103
      %s104 = sphi 0, %s101
      %s105 = sphi 0, %s104
      %s121 = sphi 0, %s105
      %s127 = sphi 0, %s129
      %s130 = sphi 0, %s127
      %s131 = sphi 0, %s130
      %s147 = sphi 0, %s131
      %s153 = sphi 0, %s155
      %s156 = sphi 0, %s153
      %s157 = sphi 0, %s156
      %s173 = sphi 0, %s157
    $region4: #{tpu_custom_call.1} parent=1 // loop_header_branch
      %21 = sbr.rel (%p19) target = $region8
    $region5: #{tpu_custom_call.1} parent=1 // loop_body
      %s23 = ssub.s32 %s18, 1
      %s24 = ssub.s32 %s18, 2
      %s25 = sadd.s32 %s18, 1
      %s27 = sadd.s32 %s26, 1
      %p30 = scmp.eq.s32.totalorder %s18, 1
      %p31 = scmp.ne.s32.totalorder %s26, %s28
      %p32 = scmp.eq.s32.totalorder %s18, 0
      %p33 = por %p31, %p32
      %p34 = scmp.ne.s32.totalorder %s26, %s28
      %p35 = scmp.eq.s32.totalorder %s23, 1
      %p36 = por %p34, %p35
      %p37 = scmp.ne.s32.totalorder %s28, %s29
      %p38 = scmp.eq.s32.totalorder %s23, 0
      %p39 = por %p37, %p38
      %p40 = scmp.ne.s32.totalorder %s28, %s29
      %p41 = scmp.eq.s32.totalorder %s24, 1
      %p42 = por %p40, %p41
      %p44 = scmp.ne.s32.totalorder %s29, %s43
      %p45 = scmp.eq.s32.totalorder %s24, 0
      %p46 = por %p44, %p45
      %s47 = ssub.s32 %s18, %s25
      %p48 = scmp.eq.s32.totalorder %s47, 0
      %s50 = sadd.s32 %s49, 1
      %s51 = scalar_select %p48, %s49, %s50
      %p54 = pneg %p48
      %p55 = scmp.eq.s32.totalorder %s18, 1
      %p56 = por %p54, %p55
      %p57 = scmp.ne.s32.totalorder %s49, %s52
      %p58 = scmp.eq.s32.totalorder %s18, 0
      %p59 = por %p57, %p58
      %p60 = scmp.ne.s32.totalorder %s49, %s52
      %p61 = scmp.eq.s32.totalorder %s23, 1
      %p62 = por %p60, %p61
      %p63 = scmp.ne.s32.totalorder %s52, %s53
      %p64 = scmp.eq.s32.totalorder %s23, 0
      %p65 = por %p63, %p64
      %p66 = scmp.ne.s32.totalorder %s52, %s53
      %p67 = scmp.eq.s32.totalorder %s24, 1
      %p68 = por %p66, %p67
      %p70 = scmp.ne.s32.totalorder %s53, %s69
      %p71 = scmp.eq.s32.totalorder %s24, 0
      %p72 = por %p70, %p71
      %s73 = ssub.s32 %s18, %s25
      %p74 = scmp.eq.s32.totalorder %s73, 0
      %s76 = sadd.s32 %s75, 1
      %s77 = scalar_select %p74, %s75, %s76
      %p80 = pneg %p74
      %p81 = scmp.eq.s32.totalorder %s18, 1
      %p82 = por %p80, %p81
      %p83 = scmp.ne.s32.totalorder %s75, %s78
      %p84 = scmp.eq.s32.totalorder %s18, 0
      %p85 = por %p83, %p84
      %p86 = scmp.ne.s32.totalorder %s75, %s78
      %p87 = scmp.eq.s32.totalorder %s23, 1
      %p88 = por %p86, %p87
      %p89 = scmp.ne.s32.totalorder %s78, %s79
      %p90 = scmp.eq.s32.totalorder %s23, 0
      %p91 = por %p89, %p90
      %p92 = scmp.ne.s32.totalorder %s78, %s79
      %p93 = scmp.eq.s32.totalorder %s24, 1
      %p94 = por %p92, %p93
      %p96 = scmp.ne.s32.totalorder %s79, %s95
      %p97 = scmp.eq.s32.totalorder %s24, 0
      %p98 = por %p96, %p97
      %s99 = ssub.s32 %s18, %s25
      %p100 = scmp.eq.s32.totalorder %s99, 0
      %s102 = sadd.s32 %s101, 1
      %s103 = scalar_select %p100, %s101, %s102
      %p106 = pneg %p100
      %p107 = scmp.eq.s32.totalorder %s18, 1
      %p108 = por %p106, %p107
      %p109 = scmp.ne.s32.totalorder %s101, %s104
      %p110 = scmp.eq.s32.totalorder %s18, 0
      %p111 = por %p109, %p110
      %p112 = scmp.ne.s32.totalorder %s101, %s104
      %p113 = scmp.eq.s32.totalorder %s23, 1
      %p114 = por %p112, %p113
      %p115 = scmp.ne.s32.totalorder %s104, %s105
      %p116 = scmp.eq.s32.totalorder %s23, 0
      %p117 = por %p115, %p116
      %p118 = scmp.ne.s32.totalorder %s104, %s105
      %p119 = scmp.eq.s32.totalorder %s24, 1
      %p120 = por %p118, %p119
      %p122 = scmp.ne.s32.totalorder %s105, %s121
      %p123 = scmp.eq.s32.totalorder %s24, 0
      %p124 = por %p122, %p123
      %s125 = ssub.s32 %s18, %s25
      %p126 = scmp.eq.s32.totalorder %s125, 0
      %s128 = sadd.s32 %s127, 1
      %s129 = scalar_select %p126, %s127, %s128
      %p132 = pneg %p126
      %p133 = scmp.eq.s32.totalorder %s18, 1
      %p134 = por %p132, %p133
      %p135 = scmp.ne.s32.totalorder %s127, %s130
      %p136 = scmp.eq.s32.totalorder %s18, 0
      %p137 = por %p135, %p136
      %p138 = scmp.ne.s32.totalorder %s127, %s130
      %p139 = scmp.eq.s32.totalorder %s23, 1
      %p140 = por %p138, %p139
      %p141 = scmp.ne.s32.totalorder %s130, %s131
      %p142 = scmp.eq.s32.totalorder %s23, 0
      %p143 = por %p141, %p142
      %p144 = scmp.ne.s32.totalorder %s130, %s131
      %p145 = scmp.eq.s32.totalorder %s24, 1
      %p146 = por %p144, %p145
      %p148 = scmp.ne.s32.totalorder %s131, %s147
      %p149 = scmp.eq.s32.totalorder %s24, 0
      %p150 = por %p148, %p149
      %s151 = ssub.s32 %s18, %s25
      %p152 = scmp.eq.s32.totalorder %s151, 0
      %s154 = sadd.s32 %s153, 1
      %s155 = scalar_select %p152, %s153, %s154
      %p158 = pneg %p152
      %p159 = scmp.eq.s32.totalorder %s18, 1
      %p160 = por %p158, %p159
      %p161 = scmp.ne.s32.totalorder %s153, %s156
      %p162 = scmp.eq.s32.totalorder %s18, 0
      %p163 = por %p161, %p162
      %p164 = scmp.ne.s32.totalorder %s153, %s156
      %p165 = scmp.eq.s32.totalorder %s23, 1
      %p166 = por %p164, %p165
      %p167 = scmp.ne.s32.totalorder %s156, %s157
      %p168 = scmp.eq.s32.totalorder %s23, 0
      %p169 = por %p167, %p168
      %p170 = scmp.ne.s32.totalorder %s156, %s157
      %p171 = scmp.eq.s32.totalorder %s24, 1
      %p172 = por %p170, %p171
      %p174 = scmp.ne.s32.totalorder %s157, %s173
      %p175 = scmp.eq.s32.totalorder %s24, 0
      %p176 = por %p174, %p175
      %p177 = scmp.le.s32.totalorder 1, %s18
      %p178 = scmp.lt.s32.totalorder %s18, 3
      %p179 = pnand %p177, %p178
      %p180 = pneg %p179
      // Predicated region
      $region9: #{tpu_custom_call.1} parent=5 // pred_check
        _
      $region10: #{tpu_custom_call.1} parent=5 // pred_check_branch
        %182 = sbr.rel (%p179) target = $region12
      $region11: #{tpu_custom_call.1} parent=5 // pred_region
        %s183 = ssub.s32 %s18, 1
        // Predicated region
        $region13: #{tpu_custom_call.1} parent=11 // pred_check
          %p184 = pneg %p39
        $region14: #{tpu_custom_call.1} parent=11 // pred_check_branch
          %186 = sbr.rel (%p184) target = $region16
        $region15: #{tpu_custom_call.1} parent=11 // pred_region
          %s188 = ssub.s32 128, 128
          %189 = vsyncadd [#allocation3], %s188
          %s191 = sshll.u32 [#allocation2], 4
          %s192 = int_to_ptr.vmem [resolvable:$true] %s191
          %194 = dma.hbm_to_vmem [thread:$0]  %s0, 128, %s192, [#allocation3]
        $region16: #{tpu_custom_call.1} parent=11 // pred_fallthru
          _
      $region12: #{tpu_custom_call.1} parent=5 // pred_fallthru
        _
      %p195 = scmp.lt.s32.totalorder %s18, 2
      // Predicated region
      $region17: #{tpu_custom_call.1} parent=5 // pred_check
        %p196 = pneg %p195
      $region18: #{tpu_custom_call.1} parent=5 // pred_check_branch
        %198 = sbr.rel (%p196) target = $region20
      $region19: #{tpu_custom_call.1} parent=5 // pred_region
        // Predicated region
        $region21: #{tpu_custom_call.1} parent=19 // pred_check
          %p199 = pneg %p59
        $region22: #{tpu_custom_call.1} parent=19 // pred_check_branch
          %201 = sbr.rel (%p199) target = $region24
        $region23: #{tpu_custom_call.1} parent=19 // pred_region
          %s202 = sand.u32 %s18, 1
          %s203 = scalar_lea.sflag [#allocation6], %s202
          %s204 = sand.u32 %s49, 1
          %s205 = smul.addr %s204, 8
          %s206 = scalar_lea.vmem [#allocation5], %s205
          %s208 = ssub.s32 128, 128
          %209 = vsyncadd %s203, %s208
          %s210 = smul.addr %s18, 128
          %s211 = scalar_lea.hbm %s1, %s210
          %s213 = sshll.u32 %s206, 4
          %s214 = int_to_ptr.vmem [resolvable:$true] %s213
          %216 = dma.hbm_to_vmem [thread:$0]  %s211, 128, %s214, %s203
        $region24: #{tpu_custom_call.1} parent=19 // pred_fallthru
          _
        // Predicated region
        $region25: #{tpu_custom_call.1} parent=19 // pred_check
          %p217 = pneg %p85
        $region26: #{tpu_custom_call.1} parent=19 // pred_check_branch
          %219 = sbr.rel (%p217) target = $region28
        $region27: #{tpu_custom_call.1} parent=19 // pred_region
          %s220 = sand.u32 %s18, 1
          %s221 = scalar_lea.sflag [#allocation6], %s220
          %s222 = sand.u32 %s75, 1
          %s223 = smul.addr %s222, 128
          %s224 = scalar_lea.vmem [#allocation7], %s223
          %s226 = ssub.s32 2048, 2048
          %227 = vsyncadd %s221, %s226
          %s228 = smul.addr %s18, 64
          %s229 = scalar_lea.hbm %s2, %s228
          %s230 = sshll.u32 %s224, 4
          %s231 = int_to_ptr.vmem [resolvable:$true] %s230
          %236 = dma.hbm_to_vmem [thread:$0]  %s229, 2048, %s231, %s221, 128, 64, 4
        $region28: #{tpu_custom_call.1} parent=19 // pred_fallthru
          _
        // Predicated region
        $region29: #{tpu_custom_call.1} parent=19 // pred_check
          %p237 = pneg %p111
        $region30: #{tpu_custom_call.1} parent=19 // pred_check_branch
          %239 = sbr.rel (%p237) target = $region32
        $region31: #{tpu_custom_call.1} parent=19 // pred_region
          %p240 = scmp.lt.s32.totalorder %s18, 1
          %s241 = scalar_select %p240, %s18, 1
          %s242 = scalar_lea.vmem %s3, %s241
        $region32: #{tpu_custom_call.1} parent=19 // pred_fallthru
          _
        // Predicated region
        $region33: #{tpu_custom_call.1} parent=19 // pred_check
          %p243 = pneg %p137
        $region34: #{tpu_custom_call.1} parent=19 // pred_check_branch
          %245 = sbr.rel (%p243) target = $region36
        $region35: #{tpu_custom_call.1} parent=19 // pred_region
          %p246 = scmp.lt.s32.totalorder %s18, 1
          %s247 = scalar_select %p246, %s18, 1
          %s248 = scalar_lea.vmem %s4, %s247
        $region36: #{tpu_custom_call.1} parent=19 // pred_fallthru
          _
      $region20: #{tpu_custom_call.1} parent=5 // pred_fallthru
        _
      %p249 = scmp.le.s32.totalorder 1, %s18
      %p250 = scmp.lt.s32.totalorder %s18, 3
      %p251 = pnand %p249, %p250
      %p252 = pneg %p251
      // Predicated region
      $region37: #{tpu_custom_call.1} parent=5 // pred_check
        _
      $region38: #{tpu_custom_call.1} parent=5 // pred_check_branch
        %254 = sbr.rel (%p251) target = $region40
      $region39: #{tpu_custom_call.1} parent=5 // pred_region
        %s255 = ssub.s32 %s18, 1
        // Predicated region
        $region41: #{tpu_custom_call.1} parent=39 // pred_check
          %p256 = pneg %p39
        $region42: #{tpu_custom_call.1} parent=39 // pred_check_branch
          %258 = sbr.rel (%p256) target = $region44
        $region43: #{tpu_custom_call.1} parent=39 // pred_region
          %259 = dma.done [#allocation3], 128
        $region44: #{tpu_custom_call.1} parent=39 // pred_fallthru
          _
        %s260 = sand.u32 %s23, 1
        %s261 = scalar_lea.sflag [#allocation6], %s260
        %s262 = sand.u32 %s52, 1
        %s263 = smul.addr %s262, 8
        %s264 = scalar_lea.vmem [#allocation5], %s263
        // Predicated region
        $region45: #{tpu_custom_call.1} parent=39 // pred_check
          %p265 = pneg %p65
        $region46: #{tpu_custom_call.1} parent=39 // pred_check_branch
          %267 = sbr.rel (%p265) target = $region48
        $region47: #{tpu_custom_call.1} parent=39 // pred_region
          %268 = dma.done %s261, 128
        $region48: #{tpu_custom_call.1} parent=39 // pred_fallthru
          _
        %s269 = sand.u32 %s23, 1
        %s270 = scalar_lea.sflag [#allocation6], %s269
        %s271 = sand.u32 %s78, 1
        %s272 = smul.addr %s271, 128
        %s273 = scalar_lea.vmem [#allocation7], %s272
        // Predicated region
        $region49: #{tpu_custom_call.1} parent=39 // pred_check
          %p274 = pneg %p91
        $region50: #{tpu_custom_call.1} parent=39 // pred_check_branch
          %276 = sbr.rel (%p274) target = $region52
        $region51: #{tpu_custom_call.1} parent=39 // pred_region
          %277 = dma.done %s270, 2048
        $region52: #{tpu_custom_call.1} parent=39 // pred_fallthru
          _
        %p278 = pneg %p39
        %p279 = pneg %p36
        %s280 = sand.u32 %s23, 1
        %s281 = scalar_lea.sflag [#allocation6], %s280
        %s282 = sand.u32 %s52, 1
        %s283 = smul.addr %s282, 8
        %s284 = scalar_lea.vmem [#allocation5], %s283
        %p285 = pneg %p65
        %p286 = pneg %p62
        %s287 = sand.u32 %s23, 1
        %s288 = scalar_lea.sflag [#allocation6], %s287
        %s289 = sand.u32 %s78, 1
        %s290 = smul.addr %s289, 128
        %s291 = scalar_lea.vmem [#allocation7], %s290
        %p292 = pneg %p91
        %p293 = pneg %p88
        %p294 = scmp.lt.s32.totalorder %s23, 1
        %s295 = scalar_select %p294, %s23, 1
        %s296 = scalar_lea.vmem %s3, %s295
        %p297 = pneg %p117
        %p298 = pneg %p114
        %p299 = scmp.lt.s32.totalorder %s23, 1
        %s300 = scalar_select %p299, %s23, 1
        %s301 = scalar_lea.vmem %s4, %s300
        %p302 = pneg %p143
        %p303 = pneg %p140
        %p304 = pneg %p169
        %p305 = pneg %p166
        %s306 = sand.u32 %s156, 1
        %s307 = scalar_lea.sflag [#allocation4], %s306
        %s308 = sand.u32 %s156, 1
        %s309 = smul.addr %s308, 8
        %s310 = scalar_lea.vmem [#allocation8], %s309
        %p311 = scmp.lt.s32.totalorder %s23, 1
        %s312 = scalar_select %p311, %s23, 1
        %s313 = scalar_lea.vmem %s3, %s312
        %p314 = scmp.lt.s32.totalorder %s23, 1
        %s315 = scalar_select %p314, %s23, 1
        %s316 = scalar_lea.vmem %s4, %s315
        %v318 = vld [vmem:[#allocation2] sm:$0xff]
        %v319 = vld [vmem:[%s273] sm:$0xf]
        %v320 = vld [vmem:[%s273 + $0x4] sm:$0xf]
        %v321 = vld [vmem:[%s273 + $0x8] sm:$0xf]
        %v322 = vld [vmem:[%s273 + $0xc] sm:$0xf]
        %v323 = vld [vmem:[%s273 + $0x10] sm:$0xf]
        %v324 = vld [vmem:[%s273 + $0x14] sm:$0xf]
        %v325 = vld [vmem:[%s273 + $0x18] sm:$0xf]
        %v326 = vld [vmem:[%s273 + $0x1c] sm:$0xf]
        %v327 = vld [vmem:[%s273 + $0x20] sm:$0xf]
        %v328 = vld [vmem:[%s273 + $0x24] sm:$0xf]
        %v329 = vld [vmem:[%s273 + $0x28] sm:$0xf]
        %v330 = vld [vmem:[%s273 + $0x2c] sm:$0xf]
        %v331 = vld [vmem:[%s273 + $0x30] sm:$0xf]
        %v332 = vld [vmem:[%s273 + $0x34] sm:$0xf]
        %v333 = vld [vmem:[%s273 + $0x38] sm:$0xf]
        %v334 = vld [vmem:[%s273 + $0x3c] sm:$0xf]
        %v335 = vld [vmem:[%s273 + $0x40] sm:$0xf]
        %v336 = vld [vmem:[%s273 + $0x44] sm:$0xf]
        %v337 = vld [vmem:[%s273 + $0x48] sm:$0xf]
        %v338 = vld [vmem:[%s273 + $0x4c] sm:$0xf]
        %v339 = vld [vmem:[%s273 + $0x50] sm:$0xf]
        %v340 = vld [vmem:[%s273 + $0x54] sm:$0xf]
        %v341 = vld [vmem:[%s273 + $0x58] sm:$0xf]
        %v342 = vld [vmem:[%s273 + $0x5c] sm:$0xf]
        %v343 = vld [vmem:[%s273 + $0x60] sm:$0xf]
        %v344 = vld [vmem:[%s273 + $0x64] sm:$0xf]
        %v345 = vld [vmem:[%s273 + $0x68] sm:$0xf]
        %v346 = vld [vmem:[%s273 + $0x6c] sm:$0xf]
        %v347 = vld [vmem:[%s273 + $0x70] sm:$0xf]
        %v348 = vld [vmem:[%s273 + $0x74] sm:$0xf]
        %v349 = vld [vmem:[%s273 + $0x78] sm:$0xf]
        %v350 = vld [vmem:[%s273 + $0x7c] sm:$0xf]
        %v352 = vunpack.c.l.b16 %v318
        %v353 = vunpack.c.h.b16 %v318
        %v354 = vpack.c.b16 %v352, %v352
        %v355 = vpack.c.b16 %v353, %v353
        %v390 = vunpack.c.l.b16 %v319
        %v391 = vunpack.c.l.b16 %v320
        %v392 = vunpack.c.l.b16 %v321
        %v393 = vunpack.c.l.b16 %v322
        %v394 = vunpack.c.l.b16 %v323
        %v395 = vunpack.c.l.b16 %v324
        %v396 = vunpack.c.l.b16 %v325
        %v397 = vunpack.c.l.b16 %v326
        %v398 = vunpack.c.l.b16 %v327
        %v399 = vunpack.c.l.b16 %v328
        %v400 = vunpack.c.l.b16 %v329
        %v401 = vunpack.c.l.b16 %v330
        %v402 = vunpack.c.l.b16 %v331
        %v403 = vunpack.c.l.b16 %v332
        %v404 = vunpack.c.l.b16 %v333
        %v405 = vunpack.c.l.b16 %v334
        %v406 = vunpack.c.l.b16 %v335
        %v407 = vunpack.c.l.b16 %v336
        %v408 = vunpack.c.l.b16 %v337
        %v409 = vunpack.c.l.b16 %v338
        %v410 = vunpack.c.l.b16 %v339
        %v411 = vunpack.c.l.b16 %v340
        %v412 = vunpack.c.l.b16 %v341
        %v413 = vunpack.c.l.b16 %v342
        %v414 = vunpack.c.l.b16 %v343
        %v415 = vunpack.c.l.b16 %v344
        %v416 = vunpack.c.l.b16 %v345
        %v417 = vunpack.c.l.b16 %v346
        %v418 = vunpack.c.l.b16 %v347
        %v419 = vunpack.c.l.b16 %v348
        %v420 = vunpack.c.l.b16 %v349
        %v421 = vunpack.c.l.b16 %v350
        %v422 = vpack.c.b16 %v391, %v390
        %v423 = vpack.c.b16 %v393, %v392
        %v424 = vpack.c.b16 %v395, %v394
        %v425 = vpack.c.b16 %v397, %v396
        %v426 = vpack.c.b16 %v399, %v398
        %v427 = vpack.c.b16 %v401, %v400
        %v428 = vpack.c.b16 %v403, %v402
        %v429 = vpack.c.b16 %v405, %v404
        %v430 = vpack.c.b16 %v407, %v406
        %v431 = vpack.c.b16 %v409, %v408
        %v432 = vpack.c.b16 %v411, %v410
        %v433 = vpack.c.b16 %v413, %v412
        %v434 = vpack.c.b16 %v415, %v414
        %v435 = vpack.c.b16 %v417, %v416
        %v436 = vpack.c.b16 %v419, %v418
        %v437 = vpack.c.b16 %v421, %v420
        %454 = vmatprep.subr.bf16.mxu0 0
        %455 = vmatpush1.bf16.msra.mxu0 %v429
        %456 = vmatprep.subr.bf16.mxu0 0
        %457 = vmatpush1.bf16.msra.mxu0 %v428
        %458 = vmatprep.subr.bf16.mxu0 0
        %459 = vmatpush1.bf16.msra.mxu0 %v427
        %460 = vmatprep.subr.bf16.mxu0 0
        %461 = vmatpush1.bf16.msra.mxu0 %v426
        %462 = vmatprep.subr.bf16.mxu0 0
        %463 = vmatpush1.bf16.msra.mxu0 %v425
        %464 = vmatprep.subr.bf16.mxu0 0
        %465 = vmatpush1.bf16.msra.mxu0 %v424
        %466 = vmatprep.subr.bf16.mxu0 0
        %467 = vmatpush1.bf16.msra.mxu0 %v423
        %468 = vmatprep.subr.bf16.mxu0 0
        %469 = vmatpush1.bf16.msra.mxu0 %v422
        %470 = vmatprep.subr.bf16.mxu0 0
        %471 = vmatpush2.bf16.msra.mxu0 %v437
        %472 = vmatprep.subr.bf16.mxu0 0
        %473 = vmatpush2.bf16.msra.mxu0 %v436
        %474 = vmatprep.subr.bf16.mxu0 0
        %475 = vmatpush2.bf16.msra.mxu0 %v435
        %476 = vmatprep.subr.bf16.mxu0 0
        %477 = vmatpush2.bf16.msra.mxu0 %v434
        %478 = vmatprep.subr.bf16.mxu0 0
        %479 = vmatpush2.bf16.msra.mxu0 %v433
        %480 = vmatprep.subr.bf16.mxu0 0
        %481 = vmatpush2.bf16.msra.mxu0 %v432
        %482 = vmatprep.subr.bf16.mxu0 0
        %483 = vmatpush2.bf16.msra.mxu0 %v431
        %484 = vmatprep.subr.bf16.mxu0 0
        %485 = vmatpush2.bf16.msra.mxu0 %v430
        %486 = vmatprep.mubr.bf16.mxu0 %v355
        %487 = vmatmul.mubr.bf16.gmra.mxu0 %v354
        %v488 = vpop.f32.mrf.mxu0
        %v489 = vadd.f32 0.0, %v488
        %v490 = vpop.f32.mrf.mxu0
        %v491 = vpop.f32.mrf.mxu0
        %v492 = vpop.f32.mrf.mxu0
        %493 = vdwg.mxu0
        %v494 = vrot.slane %v489, 4
        %v495 = vadd.f32 %v489, %v494
        %v496 = vrot.slane %v495, 2
        %v497 = vadd.f32 %v495, %v496
        %v498 = vrot.slane %v497, 1
        %v499 = vadd.f32 %v497, %v498
        %v500 = vmul.f32 %v489, %v489
        %v501 = vrot.slane %v500, 4
        %v502 = vadd.f32 %v500, %v501
        %v503 = vrot.slane %v502, 2
        %v504 = vadd.f32 %v502, %v503
        %v505 = vrot.slane %v504, 1
        %v506 = vadd.f32 %v504, %v505
        %v507 = vmul.f32 %v499, 0.125
        %v508 = vmul.f32 %v506, 0.125
        %v509 = vmul.f32 %v507, %v507
        %v510 = vsub.f32 %v508, %v509
        %v511 = vmax.f32 %v510, 0.0
        %v512 = vadd.f32 %v511, 1e-05
        %v513 = vrsqrt.pop %v512
        %v514 = vsub.f32 %v489, %v507
        %v515 = vld [vmem:[%s313] sm:$0x1]
        %v516 = vmul.f32 %v513, %v515
        %v517 = vlaneseq
        %v518 = vshrl.u32 %v517, 7
        %v519 = vsub.s32 0, %v518
        %v520 = vrot.slane %v516, %v519
        %v521 = vmul.f32 %v514, %v520
        %v522 = vld [vmem:[%s316] sm:$0x1]
        %v524 = vlaneseq
        %v525 = vshrl.u32 %v524, 7
        %v526 = vsub.s32 0, %v525
        %v527 = vrot.slane %v522, %v526
        %v529 = vadd.f32 %v521, %v527
        %v530 = vsub.f32 0.0, %v529
        %v531 = vmul.f32 %v530, 1.442695
        %v532 = vpow.pop %v531
        %v533 = vadd.f32 %v532, 1.0
        %v534 = vrcp.pop %v533
        %v535 = vld [vmem:[%s264] sm:$0xff]
        %v536 = vmul.f32 %v535, %v534
        %537 = vst [vmem:[%s310] sm:$0xff] %v536
        %s538 = sand.u32 %s156, 1
        %s539 = scalar_lea.sflag [#allocation4], %s538
        %s540 = sand.u32 %s156, 1
        %s541 = smul.addr %s540, 8
        %s542 = scalar_lea.vmem [#allocation8], %s541
        // Predicated region
        $region53: #{tpu_custom_call.1} parent=39 // pred_check
          %p543 = pneg %p166
        $region54: #{tpu_custom_call.1} parent=39 // pred_check_branch
          %545 = sbr.rel (%p543) target = $region56
        $region55: #{tpu_custom_call.1} parent=39 // pred_region
          %s547 = ssub.s32 128, 128
          %548 = vsyncadd %s539, %s547
          %s549 = smul.addr %s23, 128
          %s550 = scalar_lea.hbm %s5, %s549
          %s552 = sshll.u32 %s542, 4
          %s553 = int_to_ptr.vmem [resolvable:$true] %s552
          %555 = dma.vmem_to_hbm [thread:$0]  %s553, 128, %s550, %s539
        $region56: #{tpu_custom_call.1} parent=39 // pred_fallthru
          _
      $region40: #{tpu_custom_call.1} parent=5 // pred_fallthru
        _
      %p556 = scmp.le.s32.totalorder 2, %s18
      // Predicated region
      $region57: #{tpu_custom_call.1} parent=5 // pred_check
        %p557 = pneg %p556
      $region58: #{tpu_custom_call.1} parent=5 // pred_check_branch
        %559 = sbr.rel (%p557) target = $region60
      $region59: #{tpu_custom_call.1} parent=5 // pred_region
        %s560 = ssub.s32 %s18, 2
        // Predicated region
        $region61: #{tpu_custom_call.1} parent=59 // pred_check
          %p561 = pneg %p172
        $region62: #{tpu_custom_call.1} parent=59 // pred_check_branch
          %563 = sbr.rel (%p561) target = $region64
        $region63: #{tpu_custom_call.1} parent=59 // pred_region
          %s564 = sand.u32 %s157, 1
          %s565 = scalar_lea.sflag [#allocation4], %s564
          %s566 = sand.u32 %s157, 1
          %s567 = smul.addr %s566, 8
          %s568 = scalar_lea.vmem [#allocation8], %s567
          %569 = dma.done %s565, 128
        $region64: #{tpu_custom_call.1} parent=59 // pred_fallthru
          _
      $region60: #{tpu_custom_call.1} parent=5 // pred_fallthru
        _
    $region6: #{tpu_custom_call.1} parent=1 // loop_footer
      %s22 = sadd.s32 1, %s18
    $region7: #{tpu_custom_call.1} parent=1 // loop_footer_branch
      %17 = sbr.rel target = $region3
    $region8: #{tpu_custom_call.1} parent=1 // loop_exit
      _
    %570 = vsyncpa [#allocation3], 1
    %s571 = scalar_lea.sflag [#allocation3], 1
    %572 = vsyncpa %s571, 1
    %573 = vsyncpa [#allocation6], 1
    %s574 = scalar_lea.sflag [#allocation6], 1
    %575 = vsyncpa %s574, 1
    %576 = vsyncpa [#allocation4], 1
    %s577 = scalar_lea.sflag [#allocation4], 1
    %578 = vsyncpa %s577, 1

</llo_original>
